<compile_context>
chip_gen: v7x
topology: tpu7x:2x2x1
jax: 0.10.0
libtpu: 0.0.40
codegen_flags: <defaults>
</compile_context>

<pallas_src>
import functools
import math

import jax
import jax.numpy as jnp
from jax import lax
from jax.experimental import pallas as pl
from jax.experimental.pallas import tpu as pltpu

_VMEM_LIMIT = 32 * 1024 * 1024


def _bilinear_matrix(n_in: int, n_out: int) -> jnp.ndarray:
  """1-D bilinear (align_corners=True) interpolation matrix, (n_out, n_in) f32."""
  if n_in == 1:
    return jnp.ones((n_out, 1), jnp.float32)
  src = jnp.arange(n_out, dtype=jnp.float32) * (n_in - 1) / (n_out - 1)
  lo = jnp.clip(jnp.floor(src).astype(jnp.int32), 0, n_in - 2)
  frac = src - lo.astype(jnp.float32)
  oh_lo = jax.nn.one_hot(lo, n_in, dtype=jnp.float32)
  oh_hi = jax.nn.one_hot(lo + 1, n_in, dtype=jnp.float32)
  return (1.0 - frac)[:, None] * oh_lo + frac[:, None] * oh_hi


@functools.lru_cache(maxsize=None)
def _interp_weights(h: int, w: int):
  """Cached bf16 MXU operands: Uh (2h, h) and Uw^T (w, 2w)."""
  uh = _bilinear_matrix(h, 2 * h).astype(jnp.bfloat16)
  uwt = _bilinear_matrix(w, 2 * w).T.astype(jnp.bfloat16)
  return uh, uwt


# ----------------------------- kernel bodies -------------------------------


def _conv1x1_kernel(x_ref, w_ref, o_ref):
  # x_ref: (Cin, S); w_ref: (Cout, Cin) bf16; o_ref: (Cout, S)
  x = x_ref[...].astype(jnp.bfloat16)
  o_ref[...] = jnp.dot(
      w_ref[...], x, preferred_element_type=jnp.float32).astype(o_ref.dtype)


def _upsample_body(x_ref, uh_ref, uwt_ref):
  """Bilinear 2x upsample of a (ct, H, W) channel tile -> (ct*Hout, Wout) f32."""
  ct, h, w = x_ref.shape
  hout = uh_ref.shape[0]
  xk = x_ref[...].astype(jnp.bfloat16)
  uh_b = jnp.broadcast_to(uh_ref[...], (ct, hout, h))
  # Height upsample: batched (Hout, H) @ (H, W) over the channel tile.
  hu = lax.dot_general(
      uh_b, xk,
      dimension_numbers=(((2,), (1,)), ((0,), (0,))),
      preferred_element_type=jnp.float32)                       # (ct, Hout, W)
  hu2d = hu.astype(jnp.bfloat16).reshape(ct * hout, w)          # merge leading dims
  # Width upsample: (ct*Hout, W) @ (W, Wout) -> lane-dense output slab.
  return jnp.dot(hu2d, uwt_ref[...], preferred_element_type=jnp.float32)


def _upsample_kernel(x_ref, uh_ref, uwt_ref, o_ref):
  o_ref[...] = _upsample_body(x_ref, uh_ref, uwt_ref).astype(o_ref.dtype)


def _upsample_concat_kernel(x1_ref, x_ref, uh_ref, uwt_ref, o_ref):
  # Fused channel-concat: x1 passthrough into the first C1*Hout rows, the
  # upsampled tensor into the remaining rows (no temporary HBM buffer).
  c1_rows = x1_ref.shape[0]
  o_ref[:c1_rows, :] = x1_ref[...].astype(o_ref.dtype)
  o_ref[c1_rows:, :] = _upsample_body(x_ref, uh_ref, uwt_ref).astype(o_ref.dtype)


# ----------------------------- pallas wrappers ------------------------------


def _conv1x1(x, w_bf16, out_dtype):
  """x: (N, Cin, S) -> (N, Cout, S); per-sample (Cout,Cin)@(Cin,S) on the MXU."""
  n, cin, s = x.shape
  cout = w_bf16.shape[0]
  cost = pl.CostEstimate(
      flops=int(2 * n * cout * cin * s),
      transcendentals=0,
      bytes_accessed=int(x.size * x.dtype.itemsize + w_bf16.size * 2
                         + n * cout * s * jnp.dtype(out_dtype).itemsize))
  return pl.pallas_call(
      _conv1x1_kernel,
      out_shape=jax.ShapeDtypeStruct((n, cout, s), out_dtype),
      grid_spec=pltpu.PrefetchScalarGridSpec(
          num_scalar_prefetch=0,
          grid=(n,),
          in_specs=[
              pl.BlockSpec((None, cin, s), lambda b: (b, 0, 0)),
              pl.BlockSpec((cout, cin), lambda b: (0, 0)),
          ],
          out_specs=pl.BlockSpec((None, cout, s), lambda b: (b, 0, 0))),
      compiler_params=pltpu.CompilerParams(
          dimension_semantics=("parallel",),
          vmem_limit_bytes=_VMEM_LIMIT),
      cost_estimate=cost,
  )(x, w_bf16)


def _upsample2x(x, out_dtype):
  """x: (N, C, H, W) -> (N, C*2H, 2W) slab; bilinear 2x, align_corners=True."""
  n, c, h, w = x.shape
  hout, wout = 2 * h, 2 * w
  uh, uwt = _interp_weights(h, w)
  ct = math.gcd(c, 64)                 # channel tile: bounds VMEM, 2nd grid axis
  cost = pl.CostEstimate(
      flops=int(2 * n * c * hout * w * (h + wout)),
      transcendentals=0,
      bytes_accessed=int(x.size * x.dtype.itemsize + uh.size * 2 + uwt.size * 2
                         + n * c * hout * wout * jnp.dtype(out_dtype).itemsize))
  return pl.pallas_call(
      _upsample_kernel,
      out_shape=jax.ShapeDtypeStruct((n, c * hout, wout), out_dtype),
      grid_spec=pltpu.PrefetchScalarGridSpec(
          num_scalar_prefetch=0,
          grid=(c // ct, n),           # sample axis fastest: weights stay resident
          in_specs=[
              pl.BlockSpec((None, ct, h, w), lambda ci, b: (b, ci, 0, 0)),
              pl.BlockSpec((hout, h), lambda ci, b: (0, 0)),
              pl.BlockSpec((w, wout), lambda ci, b: (0, 0)),
          ],
          out_specs=pl.BlockSpec((None, ct * hout, wout),
                                 lambda ci, b: (b, ci, 0))),
      compiler_params=pltpu.CompilerParams(
          dimension_semantics=("parallel", "parallel"),
          vmem_limit_bytes=_VMEM_LIMIT),
      cost_estimate=cost,
  )(x, uh, uwt)


def _upsample2x_concat(x1, x, out_dtype):
  """Fused cat([x1, up2x(x)], channel): -> (N, (C1+C)*2H, 2W) slab."""
  n, c, h, w = x.shape
  hout, wout = 2 * h, 2 * w
  c1 = x1.shape[1]
  assert x1.shape == (n, c1, hout, wout), (x1.shape, (n, c1, hout, wout))
  x1s = x1.reshape(n, c1 * hout, wout)          # free contiguous HBM view
  uh, uwt = _interp_weights(h, w)
  cost = pl.CostEstimate(
      flops=int(2 * n * c * hout * w * (h + wout)),
      transcendentals=0,
      bytes_accessed=int(x.size * x.dtype.itemsize
                         + x1.size * x1.dtype.itemsize
                         + uh.size * 2 + uwt.size * 2
                         + n * (c1 + c) * hout * wout
                         * jnp.dtype(out_dtype).itemsize))
  # TODO(synk): for very large channel counts, tile the computed channels with
  # a second grid axis (as in _upsample2x); full per-sample blocks are fine here.
  return pl.pallas_call(
      _upsample_concat_kernel,
      out_shape=jax.ShapeDtypeStruct((n, (c1 + c) * hout, wout), out_dtype),
      grid_spec=pltpu.PrefetchScalarGridSpec(
          num_scalar_prefetch=0,
          grid=(n,),
          in_specs=[
              pl.BlockSpec((None, c1 * hout, wout), lambda b: (b, 0, 0)),
              pl.BlockSpec((None, c, h, w), lambda b: (b, 0, 0, 0)),
              pl.BlockSpec((hout, h), lambda b: (0, 0)),
              pl.BlockSpec((w, wout), lambda b: (0, 0)),
          ],
          out_specs=pl.BlockSpec((None, (c1 + c) * hout, wout),
                                 lambda b: (b, 0, 0))),
      compiler_params=pltpu.CompilerParams(
          dimension_semantics=("parallel",),
          vmem_limit_bytes=_VMEM_LIMIT),
      cost_estimate=cost,
  )(x1s, x, uh, uwt)


# --------------------------------- module -----------------------------------


class UNetUpSamplingBlockPallas:
  """JAX/Pallas re-implementation of UNetUpSamplingBlock (deconv=False)."""

  def __init__(self, in_channels, out_channels, deconv=False, bias=True,
               key=jax.random.PRNGKey(1)):
    if deconv:
      # TODO(synk): ConvTranspose2d(kernel=2, stride=2) path not implemented;
      # the module's default config uses deconv=False.
      raise NotImplementedError("deconv=True path not implemented")
    del bias  # non-deconv path uses Conv2d(..., bias=False); bias only affects deconv.
    self.in_channels = in_channels
    self.out_channels = out_channels
    # nn.Conv2d(in, out, 1, bias=False) weight, squeezed to (Cout, Cin).
    self.conv_w = 0.1 * jax.random.normal(
        key, (out_channels, in_channels), dtype=jnp.float32)
    self.conv_w_bf16 = self.conv_w.astype(jnp.bfloat16)     # hoisted MXU operand

  def __call__(self, *inputs):
    if len(inputs) == 2:
      return self.forward_concat(inputs[0], inputs[1])
    return self.forward_standard(inputs[0])

  def forward_standard(self, x):
    n, cin, h, w = x.shape
    cout = self.out_channels
    if cout <= cin:
      # conv-first: 1x1 conv commutes with spatial interpolation and shrinks
      # the channel count before the 4x-larger upsample work.
      y = _conv1x1(x.reshape(n, cin, h * w), self.conv_w_bf16, jnp.bfloat16)
      out = _upsample2x(y.reshape(n, cout, h, w), jnp.float32)
      return out.reshape(n, cout, 2 * h, 2 * w)
    # conv-last (Cout > Cin): upsample the (fewer) input channels first.
    up = _upsample2x(x, jnp.bfloat16)                        # (n, cin*2h, 2w)
    out = _conv1x1(up.reshape(n, cin, 4 * h * w), self.conv_w_bf16, jnp.float32)
    return out.reshape(n, cout, 2 * h, 2 * w)

  def forward_concat(self, inputs1, inputs2):
    n, cin, h, w = inputs2.shape
    cout = self.out_channels
    c1 = inputs1.shape[1]
    if cout <= cin:
      y = _conv1x1(inputs2.reshape(n, cin, h * w), self.conv_w_bf16,
                   jnp.bfloat16)
      out = _upsample2x_concat(inputs1, y.reshape(n, cout, h, w), jnp.float32)
      return out.reshape(n, c1 + cout, 2 * h, 2 * w)
    # conv-last ordering ends with the conv kernel; use a plain concat there.
    return jnp.concatenate([inputs1, self.forward_standard(inputs2)], axis=1)


# ------------------------------- reference ----------------------------------


def _reference(x, conv_w):
  """Pure-jnp f32 bilinear(align_corners=True) 2x upsample + 1x1 conv."""
  _, _, h, w = x.shape
  uh = _bilinear_matrix(h, 2 * h)
  uw = _bilinear_matrix(w, 2 * w)
  up = jnp.einsum('oh,nchw,pw->ncop', uh, x, uw)
  return jnp.einsum('kc,ncop->nkop', conv_w, up)


if __name__ == "__main__":
  N, Cin, Cout, H, W = 2, 8, 4, 16, 16
  key = jax.random.PRNGKey(0)
  k1, k2 = jax.random.split(key)
  x2 = jax.random.normal(k1, (N, Cin, H, W), dtype=jnp.float32)        # to upsample
  x1 = jax.random.normal(k2, (N, Cout, 2 * H, 2 * W), dtype=jnp.float32)  # skip conn.

  block = UNetUpSamplingBlockPallas(Cin, Cout, deconv=False)

  # forward_standard (conv-first path: Cout < Cin)
  out_std = jax.block_until_ready(block(x2))
  assert out_std.shape == (N, Cout, 2 * H, 2 * W), out_std.shape

  # forward_concat (fused concat kernel)
  out_cat = jax.block_until_ready(block(x1, x2))
  assert out_cat.shape == (N, 2 * Cout, 2 * H, 2 * W), out_cat.shape

  # numerical check vs. pure-f32 reference (kernel uses bf16 MXU operands).
  tol = dict(atol=3e-2, rtol=3e-2)
  ref = _reference(x2, block.conv_w)
  assert jnp.allclose(out_std, ref, **tol)
  assert jnp.allclose(out_cat[:, Cout:], ref, **tol)
  assert bool(jnp.array_equal(out_cat[:, :Cout], x1))   # exact passthrough

  # also exercise the conv-last ordering (Cout > Cin)
  block_rev = UNetUpSamplingBlockPallas(Cout, Cin, deconv=False,
                                        key=jax.random.PRNGKey(2))
  out_rev = jax.block_until_ready(block_rev(x1))
  assert out_rev.shape == (N, Cin, 4 * H, 4 * W), out_rev.shape
  ref_rev = _reference(x1, block_rev.conv_w)
  assert jnp.allclose(out_rev, ref_rev, **tol)

  print("KERNEL_OK")
</pallas_src>

<mosaic_0001>
module attributes {stable_mosaic.version = 11 : i64} {
  func.func @_conv1x1_kernel(%arg0: i32, %arg1: memref<1x8x256xf32, #tpu.memory_space<vmem>>, %arg2: memref<4x8xbf16, #tpu.memory_space<vmem>>, %arg3: memref<1x4x256xbf16, #tpu.memory_space<vmem>>) attributes {dimension_semantics = [#tpu.dimension_semantics<parallel>], iteration_bounds = array<i64: 2>, scalar_prefetch = 0 : i64, scratch_operands = 0 : i64, tpu.core_type = #tpu.core_type<tc>, window_params = [{transform_indices = @transform_0, window_bounds = array<i64: 1, 8, 256>}, {pipeline_mode = #tpu.pipeline_mode<synchronous>, transform_indices = @transform_1, window_bounds = array<i64: 4, 8>}, {transform_indices = @transform_2, window_bounds = array<i64: 1, 4, 256>}]} {
    %c0 = arith.constant 0 : index
    %c0_0 = arith.constant 0 : index
    %c0_1 = arith.constant 0 : index
    %0 = vector.load %arg1[%c0, %c0_0, %c0_1] : memref<1x8x256xf32, #tpu.memory_space<vmem>>, vector<1x8x256xf32>
    %1 = vector.shape_cast %0 : vector<1x8x256xf32> to vector<8x256xf32>
    %2 = arith.truncf %1 : vector<8x256xf32> to vector<8x256xbf16>
    %c0_2 = arith.constant 0 : index
    %c0_3 = arith.constant 0 : index
    %3 = vector.load %arg2[%c0_2, %c0_3] : memref<4x8xbf16, #tpu.memory_space<vmem>>, vector<4x8xbf16>
    %cst = arith.constant dense<0.000000e+00> : vector<4x256xf32>
    %4 = tpu.matmul %3, %2, %cst {dimension_numbers = #tpu.dot_dimension_numbers<[1], [0], [0], [1], [0, 0, 1, 1], [], []>} : vector<4x8xbf16>, vector<8x256xbf16>, vector<4x256xf32> -> vector<4x256xf32>
    %5 = arith.truncf %4 : vector<4x256xf32> to vector<4x256xbf16>
    %c0_4 = arith.constant 0 : index
    %c0_5 = arith.constant 0 : index
    %c0_6 = arith.constant 0 : index
    %6 = vector.load %arg3[%c0_4, %c0_5, %c0_6] : memref<1x4x256xbf16, #tpu.memory_space<vmem>>, vector<1x4x256xbf16>
    %7 = vector.shape_cast %6 : vector<1x4x256xbf16> to vector<4x256xbf16>
    %8 = vector.shape_cast %5 : vector<4x256xbf16> to vector<1x4x256xbf16>
    tpu.vector_store %arg3[%c0_4, %c0_5, %c0_6], %8 {strides = array<i32>} : memref<1x4x256xbf16, #tpu.memory_space<vmem>>, vector<1x4x256xbf16>,
    return
  }
  func.func @transform_0(%arg0: i32) -> (i32, i32, i32) {
    %c0_i32 = arith.constant 0 : i32
    %c0_i32_0 = arith.constant 0 : i32
    %c0_i32_1 = arith.constant 0 : i32
    return %arg0, %c0_i32, %c0_i32_0 : i32, i32, i32
  }
  func.func @transform_1(%arg0: i32) -> (i32, i32) {
    %c0_i32 = arith.constant 0 : i32
    %c0_i32_0 = arith.constant 0 : i32
    %c0_i32_1 = arith.constant 0 : i32
    return %c0_i32, %c0_i32_0 : i32, i32
  }
  func.func @transform_2(%arg0: i32) -> (i32, i32, i32) {
    %c0_i32 = arith.constant 0 : i32
    %c0_i32_0 = arith.constant 0 : i32
    %c0_i32_1 = arith.constant 0 : i32
    return %arg0, %c0_i32, %c0_i32_0 : i32, i32, i32
  }
}

</mosaic_0001>

<llo_original>
// kernel: tpu_custom_call.1
$region0: #{tpu_custom_call.1}
  #allocation0 [shape = 'u32[]', space=smem, size = 0x4, offset = 0x4, fixed_abs, tag = 'smem constant byte address 0x4 - core index']
  #allocation1 [shape = 'u32[144,128]{1,0:T(1,128)}', space=vmem, size = 0x12000, scoped, tag = 'internal scratch']
  %s0 = inlined_call_operand.hbm [shape: f32[2,8,256], index: 0, kind: input, shape index: {}]
  %s1 = inlined_call_operand.vmem [shape: bf16[4,8], index: 1, kind: input, shape index: {}]
  %s2 = inlined_call_operand.hbm [shape: bf16[2,4,256], index: 2, kind: output, shape index: {}]
  %s3 = sld [smem:[#allocation0]]
  $region45: #{tpu_custom_call.1} parent=0
    _
  %s5 = ssub.s32 1, %s3
  %s6 = scalar_select 0, %s5, %s3
  $region1: #{tpu_custom_call.1} parent=0
    #allocation2 [shape = 'u8[16384]{0}', space=vmem, size = 0x4000, scoped, tag = 'input window, operand 0']
    #allocation3 [shape = 's32[2]{0}', space=sflag, size = 0x8, scoped, tag = 'scoped memory for tpu_custom_call.1']
    #allocation4 [shape = 's32[2]{0}', space=sflag, size = 0x8, scoped, tag = 'scoped memory for tpu_custom_call.1']
    #allocation5 [shape = 'u8[4096]{0}', space=vmem, size = 0x1000, scoped, tag = 'output window, operand 0']
    %7 = vsyncpa [#allocation3], 0
    %s8 = scalar_lea.sflag [#allocation3], 1
    %9 = vsyncpa %s8, 0
    %10 = vsyncpa [#allocation4], 0
    %s11 = scalar_lea.sflag [#allocation4], 1
    %12 = vsyncpa %s11, 0
    loop: start=0, step=1, limit=4
    $region2: #{tpu_custom_call.1} parent=1 // loop_pre_header
      _
    $region3: #{tpu_custom_call.1} parent=1 // loop_header
      %s14 = sphi 0, %s18
      %p15 = scmp.ge.s32.totalorder %s14, 4
      %s24 = sphi 0, %s26
      %s27 = sphi 0, %s24
      %s28 = sphi 0, %s27
      %s44 = sphi 0, %s28
      %s48 = sphi 0, %s48
      %s50 = sphi 0, %s48
      %s51 = sphi 0, %s50
      %s65 = sphi 0, %s51
      %s71 = sphi 0, %s73
      %s74 = sphi 0, %s71
      %s75 = sphi 0, %s74
      %s91 = sphi 0, %s75
    $region4: #{tpu_custom_call.1} parent=1 // loop_header_branch
      %17 = sbr.rel (%p15) target = $region8
    $region5: #{tpu_custom_call.1} parent=1 // loop_body
      %s19 = ssub.s32 %s14, 1
      %s20 = ssub.s32 %s14, 2
      %s21 = sadd.s32 %s14, 1
      %s22 = ssub.s32 %s14, %s21
      %p23 = scmp.eq.s32.totalorder %s22, 0
      %s25 = sadd.s32 %s24, 1
      %s26 = scalar_select %p23, %s24, %s25
      %p29 = pneg %p23
      %p30 = scmp.eq.s32.totalorder %s14, 1
      %p31 = por %p29, %p30
      %p32 = scmp.ne.s32.totalorder %s24, %s27
      %p33 = scmp.eq.s32.totalorder %s14, 0
      %p34 = por %p32, %p33
      %p35 = scmp.ne.s32.totalorder %s24, %s27
      %p36 = scmp.eq.s32.totalorder %s19, 1
      %p37 = por %p35, %p36
      %p38 = scmp.ne.s32.totalorder %s27, %s28
      %p39 = scmp.eq.s32.totalorder %s19, 0
      %p40 = por %p38, %p39
      %p41 = scmp.ne.s32.totalorder %s27, %s28
      %p42 = scmp.eq.s32.totalorder %s20, 1
      %p43 = por %p41, %p42
      %p45 = scmp.ne.s32.totalorder %s28, %s44
      %p46 = scmp.eq.s32.totalorder %s20, 0
      %p47 = por %p45, %p46
      %s49 = sadd.s32 %s48, 1
      %p52 = scmp.eq.s32.totalorder %s14, 1
      %p53 = scmp.ne.s32.totalorder %s48, %s50
      %p54 = scmp.eq.s32.totalorder %s14, 0
      %p55 = por %p53, %p54
      %p56 = scmp.ne.s32.totalorder %s48, %s50
      %p57 = scmp.eq.s32.totalorder %s19, 1
      %p58 = por %p56, %p57
      %p59 = scmp.ne.s32.totalorder %s50, %s51
      %p60 = scmp.eq.s32.totalorder %s19, 0
      %p61 = por %p59, %p60
      %p62 = scmp.ne.s32.totalorder %s50, %s51
      %p63 = scmp.eq.s32.totalorder %s20, 1
      %p64 = por %p62, %p63
      %p66 = scmp.ne.s32.totalorder %s51, %s65
      %p67 = scmp.eq.s32.totalorder %s20, 0
      %p68 = por %p66, %p67
      %s69 = ssub.s32 %s14, %s21
      %p70 = scmp.eq.s32.totalorder %s69, 0
      %s72 = sadd.s32 %s71, 1
      %s73 = scalar_select %p70, %s71, %s72
      %p76 = pneg %p70
      %p77 = scmp.eq.s32.totalorder %s14, 1
      %p78 = por %p76, %p77
      %p79 = scmp.ne.s32.totalorder %s71, %s74
      %p80 = scmp.eq.s32.totalorder %s14, 0
      %p81 = por %p79, %p80
      %p82 = scmp.ne.s32.totalorder %s71, %s74
      %p83 = scmp.eq.s32.totalorder %s19, 1
      %p84 = por %p82, %p83
      %p85 = scmp.ne.s32.totalorder %s74, %s75
      %p86 = scmp.eq.s32.totalorder %s19, 0
      %p87 = por %p85, %p86
      %p88 = scmp.ne.s32.totalorder %s74, %s75
      %p89 = scmp.eq.s32.totalorder %s20, 1
      %p90 = por %p88, %p89
      %p92 = scmp.ne.s32.totalorder %s75, %s91
      %p93 = scmp.eq.s32.totalorder %s20, 0
      %p94 = por %p92, %p93
      %p95 = scmp.le.s32.totalorder 1, %s14
      %p96 = scmp.lt.s32.totalorder %s14, 3
      %p97 = pnand %p95, %p96
      %p98 = pneg %p97
      // Predicated region
      $region9: #{tpu_custom_call.1} parent=5 // pred_check
        _
      $region10: #{tpu_custom_call.1} parent=5 // pred_check_branch
        %100 = sbr.rel (%p97) target = $region12
      $region11: #{tpu_custom_call.1} parent=5 // pred_region
        %s101 = ssub.s32 %s14, 1
        // Predicated region
        $region13: #{tpu_custom_call.1} parent=11 // pred_check
          %p102 = pneg %p61
        $region14: #{tpu_custom_call.1} parent=11 // pred_check_branch
          %104 = sbr.rel (%p102) target = $region16
        $region15: #{tpu_custom_call.1} parent=11 // pred_region
          _
        $region16: #{tpu_custom_call.1} parent=11 // pred_fallthru
          _
      $region12: #{tpu_custom_call.1} parent=5 // pred_fallthru
        _
      %p105 = scmp.lt.s32.totalorder %s14, 2
      // Predicated region
      $region17: #{tpu_custom_call.1} parent=5 // pred_check
        %p106 = pneg %p105
      $region18: #{tpu_custom_call.1} parent=5 // pred_check_branch
        %108 = sbr.rel (%p106) target = $region20
      $region19: #{tpu_custom_call.1} parent=5 // pred_region
        // Predicated region
        $region21: #{tpu_custom_call.1} parent=19 // pred_check
          %p109 = pneg %p34
        $region22: #{tpu_custom_call.1} parent=19 // pred_check_branch
          %111 = sbr.rel (%p109) target = $region24
        $region23: #{tpu_custom_call.1} parent=19 // pred_region
          %s112 = sand.u32 %s24, 1
          %s113 = scalar_lea.sflag [#allocation3], %s112
          %s114 = sand.u32 %s24, 1
          %s115 = smul.addr %s114, 16
          %s116 = scalar_lea.vmem [#allocation2], %s115
          %s118 = ssub.s32 256, 256
          %119 = vsyncadd %s113, %s118
          %s120 = smul.addr %s14, 2
          %s121 = smul.addr %s120, 128
          %s122 = scalar_lea.hbm %s0, %s121
          %s124 = sshll.u32 %s116, 4
          %s125 = int_to_ptr.vmem [resolvable:$true] %s124
          %127 = dma.hbm_to_vmem [thread:$0]  %s122, 256, %s125, %s113
        $region24: #{tpu_custom_call.1} parent=19 // pred_fallthru
          _
      $region20: #{tpu_custom_call.1} parent=5 // pred_fallthru
        _
      %p128 = scmp.le.s32.totalorder 1, %s14
      %p129 = scmp.lt.s32.totalorder %s14, 3
      %p130 = pnand %p128, %p129
      %p131 = pneg %p130
      // Predicated region
      $region25: #{tpu_custom_call.1} parent=5 // pred_check
        _
      $region26: #{tpu_custom_call.1} parent=5 // pred_check_branch
        %133 = sbr.rel (%p130) target = $region28
      $region27: #{tpu_custom_call.1} parent=5 // pred_region
        %s134 = ssub.s32 %s14, 1
        %s135 = sand.u32 %s27, 1
        %s136 = scalar_lea.sflag [#allocation3], %s135
        %s137 = sand.u32 %s27, 1
        %s138 = smul.addr %s137, 16
        %s139 = scalar_lea.vmem [#allocation2], %s138
        // Predicated region
        $region29: #{tpu_custom_call.1} parent=27 // pred_check
          %p140 = pneg %p40
        $region30: #{tpu_custom_call.1} parent=27 // pred_check_branch
          %142 = sbr.rel (%p140) target = $region32
        $region31: #{tpu_custom_call.1} parent=27 // pred_region
          %143 = dma.done %s136, 256
        $region32: #{tpu_custom_call.1} parent=27 // pred_fallthru
          _
        %s144 = sand.u32 %s27, 1
        %s145 = scalar_lea.sflag [#allocation3], %s144
        %s146 = sand.u32 %s27, 1
        %s147 = smul.addr %s146, 16
        %s148 = scalar_lea.vmem [#allocation2], %s147
        %p149 = pneg %p40
        %p150 = pneg %p37
        %p151 = pneg %p61
        %p152 = pneg %p58
        %p153 = pneg %p87
        %p154 = pneg %p84
        %s155 = sand.u32 %s74, 1
        %s156 = scalar_lea.sflag [#allocation4], %s155
        %s157 = sand.u32 %s74, 1
        %s158 = smul.addr %s157, 4
        %s159 = scalar_lea.vmem [#allocation5], %s158
        %v161 = vld [vmem:[%s139] sm:$0xff]
        %v162 = vld [vmem:[%s139 + $0x8] sm:$0xff]
        %v163 = vpack.c.bf16 %v161, %v161
        %v164 = vpack.c.bf16 %v162, %v162
        %v165 = vld [vmem:[%s1] sm:$0x3]
        %vm166 = vcmask 64512
        %v168 = vsel %vm166, %v165, 0
        %vm170 = vcmask 1043456
        %v172 = vsel %vm170, %v163, 0
        %v175 = vsel %vm170, %v164, 0
        %177 = vmatprep.subr.bf16.mxu0 %v175
        %178 = vmatpush1.bf16.msra.mxu0 %v172
        %179 = vmatprep.subr.bf16.mxu0 0
        %180 = vmatpush1.bf16.msra.mxu0 0
        %181 = vmatprep.subr.bf16.mxu0 0
        %182 = vmatpush1.bf16.msra.mxu0 0
        %183 = vmatprep.subr.bf16.mxu0 0
        %184 = vmatpush1.bf16.msra.mxu0 0
        %185 = vmatprep.subr.bf16.mxu0 0
        %186 = vmatpush1.bf16.msra.mxu0 0
        %187 = vmatprep.subr.bf16.mxu0 0
        %188 = vmatpush1.bf16.msra.mxu0 0
        %189 = vmatprep.subr.bf16.mxu0 0
        %190 = vmatpush1.bf16.msra.mxu0 0
        %191 = vmatprep.subr.bf16.mxu0 0
        %192 = vmatpush1.bf16.msra.mxu0 0
        %193 = vmatprep.subr.bf16.mxu0 0
        %194 = vmatpush1.bf16.msra.mxu0 0
        %195 = vmatprep.subr.bf16.mxu0 0
        %196 = vmatpush1.bf16.msra.mxu0 0
        %197 = vmatprep.subr.bf16.mxu0 0
        %198 = vmatpush1.bf16.msra.mxu0 0
        %199 = vmatprep.subr.bf16.mxu0 0
        %200 = vmatpush1.bf16.msra.mxu0 0
        %201 = vmatprep.subr.bf16.mxu0 0
        %202 = vmatpush1.bf16.msra.mxu0 0
        %203 = vmatprep.subr.bf16.mxu0 0
        %204 = vmatpush1.bf16.msra.mxu0 0
        %205 = vmatprep.subr.bf16.mxu0 0
        %206 = vmatpush1.bf16.msra.mxu0 0
        %207 = vmatprep.subr.bf16.mxu0 0
        %208 = vmatpush1.bf16.msra.mxu0 0
        %209 = vmatprep.mubr.bf16.mxu0 0
        %210 = vmatmul.mubr.bf16.gmra.mrb[0].mxu0 %v168
        %v211 = vpop.f32.mrb[0].mxu0
        %v212 = vadd.f32 0.0, %v211
        %v213 = vpop.f32.mrb[0].mxu0
        %v214 = vadd.f32 0.0, %v213
        %v215 = vpop.f32.mrb[0].mxu0
        %v216 = vpop.f32.mrb[0].mxu0
        %217 = vdwg.mxu0
        %v218 = vpack.c.bf16 %v212, %v212
        %v219 = vpack.c.bf16 %v214, %v214
        %v222 = vcombine.low %v218, %v219
        %v224 = vunpack.c.l.s4 1983009808
        %v225 = vunpack.c.0.s8 %v224
        %v226 = vlaneseq
        %v227 = vshrl.u32 %v226, 7
        %v228 = vsub.s32 %v225, %v227
        %v229 = vrot.slane %v222, %v228
        %231 = vst [vmem:[%s159] sm:$0xf] %v229
        %s232 = sand.u32 %s74, 1
        %s233 = scalar_lea.sflag [#allocation4], %s232
        %s234 = sand.u32 %s74, 1
        %s235 = smul.addr %s234, 4
        %s236 = scalar_lea.vmem [#allocation5], %s235
        // Predicated region
        $region33: #{tpu_custom_call.1} parent=27 // pred_check
          %p237 = pneg %p84
        $region34: #{tpu_custom_call.1} parent=27 // pred_check_branch
          %239 = sbr.rel (%p237) target = $region36
        $region35: #{tpu_custom_call.1} parent=27 // pred_region
          %s241 = ssub.s32 64, 64
          %242 = vsyncadd %s233, %s241
          %s243 = smul.addr %s19, 2
          %s244 = smul.addr %s243, 32
          %s245 = scalar_lea.hbm %s2, %s244
          %s247 = sshll.u32 %s236, 4
          %s248 = int_to_ptr.vmem [resolvable:$true] %s247
          %250 = dma.vmem_to_hbm [thread:$0]  %s248, 64, %s245, %s233
        $region36: #{tpu_custom_call.1} parent=27 // pred_fallthru
          _
      $region28: #{tpu_custom_call.1} parent=5 // pred_fallthru
        _
      %p251 = scmp.le.s32.totalorder 2, %s14
      // Predicated region
      $region37: #{tpu_custom_call.1} parent=5 // pred_check
        %p252 = pneg %p251
      $region38: #{tpu_custom_call.1} parent=5 // pred_check_branch
        %254 = sbr.rel (%p252) target = $region40
      $region39: #{tpu_custom_call.1} parent=5 // pred_region
        %s255 = ssub.s32 %s14, 2
        // Predicated region
        $region41: #{tpu_custom_call.1} parent=39 // pred_check
          %p256 = pneg %p90
        $region42: #{tpu_custom_call.1} parent=39 // pred_check_branch
          %258 = sbr.rel (%p256) target = $region44
        $region43: #{tpu_custom_call.1} parent=39 // pred_region
          %s259 = sand.u32 %s75, 1
          %s260 = scalar_lea.sflag [#allocation4], %s259
          %s261 = sand.u32 %s75, 1
          %s262 = smul.addr %s261, 4
          %s263 = scalar_lea.vmem [#allocation5], %s262
          %264 = dma.done %s260, 64
        $region44: #{tpu_custom_call.1} parent=39 // pred_fallthru
          _
      $region40: #{tpu_custom_call.1} parent=5 // pred_fallthru
        _
    $region6: #{tpu_custom_call.1} parent=1 // loop_footer
      %s18 = sadd.s32 1, %s14
    $region7: #{tpu_custom_call.1} parent=1 // loop_footer_branch
      %13 = sbr.rel target = $region3
    $region8: #{tpu_custom_call.1} parent=1 // loop_exit
      _
    %265 = vsyncpa [#allocation3], 1
    %s266 = scalar_lea.sflag [#allocation3], 1
    %267 = vsyncpa %s266, 1
    %268 = vsyncpa [#allocation4], 1
    %s269 = scalar_lea.sflag [#allocation4], 1
    %270 = vsyncpa %s269, 1

</llo_original>
